<compile_context>
chip_gen: v7x
topology: tpu7x:2x2x1
jax: 0.10.0
libtpu: 0.0.40
codegen_flags: <defaults>
</compile_context>

<pallas_src>
import jax
import jax.numpy as jnp
from jax.experimental import pallas as pl
from jax.experimental.pallas import tpu as pltpu

EPS = 1e-5
SUBLANE = 8  # f32 sublane granularity for batch tiles


def _round_up(x, m):
    return ((x + m - 1) // m) * m


def _num_tensorcores():
    """Best-effort TensorCore count of device 0 (2 on v7x megacore, else 1)."""
    try:
        dev = jax.devices()[0]
        for attr in ("num_cores", "core_count"):
            v = getattr(dev, attr, None)
            if isinstance(v, int) and v > 0:
                return v
    except Exception:
        pass
    return 1


def _select_batch_tile(batch, tm_hint, num_cores):
    """Rows-per-grid-step.

    * 1 TensorCore: minimize step count (grid=1 for small batches).
    * 2 TensorCores: even number of steps >= 2 so both cores get equal work.
    * tm must be a multiple of 8 (f32 sublane) unless it equals the batch
      (full-dim blocks are exempt from the (8,128) divisibility rule).
    """
    batch = int(batch)
    if num_cores > 1 and batch >= 2 * SUBLANE:
        steps = max(pl.cdiv(batch, tm_hint), 2)
        if steps % 2:
            steps += 1
        return _round_up(pl.cdiv(batch, steps), SUBLANE)
    if batch <= tm_hint:
        return batch  # single full-batch block; no batch pad needed
    return _round_up(tm_hint, SUBLANE)


def _make_kernel(n_layers, compute_dtype):
    """(Linear+Tanh)*(n_layers-1) followed by a final Linear."""

    def kernel(*refs):
        # refs = [x, w1, b1, ..., wL, bL, out]
        x_ref = refs[0]
        out_ref = refs[-1]
        wb = refs[1:-1]

        # Cast to the MXU operand dtype in-kernel: x streams in as f32 so the
        # wrapper never materializes a bf16 copy of the input in HBM.
        h = x_ref[...].astype(compute_dtype)

        for i in range(n_layers - 1):
            w = wb[2 * i][...]          # (D_in, D_out) compute_dtype
            b = wb[2 * i + 1][...]      # (1, D_out)    float32
            z = jnp.dot(h, w, preferred_element_type=jnp.float32) + b
            h = jnp.tanh(z).astype(compute_dtype)

        w_last = wb[-2][...]            # (D_last, N) compute_dtype
        b_last = wb[-1][...]            # (1, N)      float32
        out_ref[...] = jnp.dot(h, w_last, preferred_element_type=jnp.float32) + b_last

    return kernel


def prepare_estimator_params(bn_params, weights, biases, *, compute_dtype=jnp.bfloat16):
    """Fold eval-mode BatchNorm into the first Linear and cast to MXU dtype.

    Call once per parameter update (NOT per forward) so the fold/cast ops stay
    off the per-call hot path.

      BN(x) = x*s + (beta - mean*s),  s = gamma / sqrt(var + eps)
      BN(x) @ W1 + b1 = x @ (s^T * W1) + ((beta - mean*s) @ W1 + b1)
    """
    D = weights[0].shape[0]
    s = bn_params["gamma"] * jax.lax.rsqrt(bn_params["var"] + EPS)   # (1, D)
    shift = bn_params["beta"] - bn_params["mean"] * s                # (1, D)
    w0 = weights[0] * s.reshape(D, 1)                                # (D, H1)
    b0 = biases[0] + shift @ weights[0]                              # (1, H1)
    ws = [w0] + list(weights[1:])
    bs = [b0] + list(biases[1:])
    ws = tuple(w.astype(compute_dtype) for w in ws)
    bs = tuple(b.astype(jnp.float32).reshape(1, -1) for b in bs)
    return ws, bs


def estimator_forward(x, ws, bs, *, tm=1024):
    """EstimatorNetwork forward pass as a single Pallas kernel.

    Args:
      x:  (B, *state_shape) state tensor (flattened internally, read as f32).
      ws: tuple of weight matrices from prepare_estimator_params (bf16).
      bs: tuple of (1, D_out) float32 biases (BN already folded into bs[0]).
      tm: target rows per grid step for large batches.

    Returns:
      (B, num_actions) float32 Q-values.
    """
    B = x.shape[0]
    x_flat = x.reshape(B, -1)
    if x_flat.dtype != jnp.float32:
        x_flat = x_flat.astype(jnp.float32)
    D = x_flat.shape[1]
    assert ws[0].shape[0] == D, "flattened state dim does not match first layer"
    compute_dtype = ws[0].dtype
    n_out = ws[-1].shape[1]

    num_cores = _num_tensorcores()
    tm_eff = _select_batch_tile(B, tm, num_cores)
    grid = (pl.cdiv(B, tm_eff),)

    # x/out stream per grid step (ragged last block handled by Pallas block
    # clipping -- padded input rows only affect padded, masked-out output
    # rows); weights & biases keep block index (0,0) so they are DMA'd once
    # and stay resident in VMEM. (Single-buffering them via pl.Buffered(1)
    # would shave a little VMEM/bookkeeping but VMEM is far from binding here.)
    in_specs = [pl.BlockSpec((tm_eff, D), lambda i: (i, 0))]
    inputs = [x_flat]
    for w, b in zip(ws, bs):
        in_specs.append(pl.BlockSpec(w.shape, lambda i: (0, 0)))
        in_specs.append(pl.BlockSpec(b.shape, lambda i: (0, 0)))
        inputs.append(w)
        inputs.append(b)
    out_spec = pl.BlockSpec((tm_eff, n_out), lambda i: (i, 0))

    # Cost hint for the XLA scheduler.
    dims = [D] + [w.shape[1] for w in ws]
    flops = 2 * B * sum(dims[i] * dims[i + 1] for i in range(len(dims) - 1))
    transcendentals = B * sum(dims[1:-1])                         # tanh count
    bytes_accessed = (
        x_flat.size * 4
        + B * n_out * 4
        + sum(w.size * w.dtype.itemsize for w in ws)
        + sum(b.size * 4 for b in bs)
    )

    return pl.pallas_call(
        _make_kernel(len(ws), compute_dtype),
        out_shape=jax.ShapeDtypeStruct((B, n_out), jnp.float32),
        grid=grid,
        in_specs=in_specs,
        out_specs=out_spec,
        compiler_params=pltpu.CompilerParams(
            dimension_semantics=("parallel",)),   # megacore split on v7x
        cost_estimate=pl.CostEstimate(
            flops=int(flops),
            transcendentals=int(transcendentals),
            bytes_accessed=int(bytes_accessed)),
    )(*inputs)


def _reference_forward(x, bn_params, weights, biases):
    """Pure-JAX f32 reference (unfused BN) for correctness checking."""
    B = x.shape[0]
    h = x.reshape(B, -1).astype(jnp.float32)
    inv_std = jax.lax.rsqrt(bn_params["var"] + EPS)
    h = (h - bn_params["mean"]) * inv_std * bn_params["gamma"] + bn_params["beta"]
    for i in range(len(weights) - 1):
        h = jnp.tanh(h @ weights[i] + biases[i])
    return h @ weights[-1] + biases[-1]


if __name__ == "__main__":
    # Configuration consistent with EstimatorNetwork.__init__:
    #   state_shape = [4, 16] -> flattened D = 64
    #   mlp_layers  = [32, 32]
    #   num_actions = 2
    batch = 256
    state_shape = (4, 16)
    mlp_layers = [32, 32]
    num_actions = 2

    D = int(state_shape[0] * state_shape[1])
    layer_dims = [D] + mlp_layers + [num_actions]

    key = jax.random.PRNGKey(0)

    # Input state: (batch, *state_shape), float32 (PyTorch default dtype).
    key, k = jax.random.split(key)
    x = jax.random.normal(k, (batch,) + state_shape, dtype=jnp.float32)

    # BatchNorm1d parameters (eval mode): running_mean/var + affine gamma/beta.
    key, k1, k2, k3, k4 = jax.random.split(key, 5)
    bn_params = {
        "mean":  0.1 * jax.random.normal(k1, (1, D), dtype=jnp.float32),
        "var":   jnp.abs(jax.random.normal(k2, (1, D), dtype=jnp.float32)) + 0.5,
        "gamma": 1.0 + 0.1 * jax.random.normal(k3, (1, D), dtype=jnp.float32),
        "beta":  0.1 * jax.random.normal(k4, (1, D), dtype=jnp.float32),
    }

    # Linear layers, PyTorch-default-style uniform(-1/sqrt(fan_in), 1/sqrt(fan_in)).
    weights, biases = [], []
    for i in range(len(layer_dims) - 1):
        fan_in, fan_out = layer_dims[i], layer_dims[i + 1]
        bound = 1.0 / (fan_in ** 0.5)
        key, kw, kb = jax.random.split(key, 3)
        weights.append(jax.random.uniform(kw, (fan_in, fan_out), jnp.float32, -bound, bound))
        biases.append(jax.random.uniform(kb, (1, fan_out), jnp.float32, -bound, bound))

    # One-time parameter prep (BN fold + bf16 cast), then a jitted forward.
    ws, bs = prepare_estimator_params(bn_params, weights, biases)
    forward = jax.jit(estimator_forward)

    # --- 1) Default path (grid=1 on single-TC chips, even grid on megacore) --
    out = jax.block_until_ready(forward(x, ws, bs))
    ref = _reference_forward(x, bn_params, weights, biases)
    assert out.shape == (batch, num_actions)
    assert jnp.allclose(out, ref, atol=2e-2, rtol=2e-2), "Pallas output mismatch (default path)"

    # --- 2) Multi-step grid with a ragged last block (exercise block clipping)
    b2 = 250
    x2 = x[:b2]
    out2 = jax.block_until_ready(estimator_forward(x2, ws, bs, tm=64))
    ref2 = _reference_forward(x2, bn_params, weights, biases)
    assert out2.shape == (b2, num_actions)
    assert jnp.allclose(out2, ref2, atol=2e-2, rtol=2e-2), "Pallas output mismatch (ragged path)"

    print("KERNEL_OK")
</pallas_src>

<mosaic_0001>
module attributes {stable_mosaic.version = 11 : i64} {
  func.func @kernel(%arg0: i32, %arg1: memref<256x64xf32, #tpu.memory_space<vmem>>, %arg2: memref<64x32xbf16, #tpu.memory_space<vmem>>, %arg3: memref<1x32xf32, #tpu.memory_space<vmem>>, %arg4: memref<32x32xbf16, #tpu.memory_space<vmem>>, %arg5: memref<1x32xf32, #tpu.memory_space<vmem>>, %arg6: memref<32x2xbf16, #tpu.memory_space<vmem>>, %arg7: memref<1x2xf32, #tpu.memory_space<vmem>>, %arg8: memref<256x2xf32, #tpu.memory_space<vmem>>) attributes {dimension_semantics = [#tpu.dimension_semantics<parallel>], iteration_bounds = array<i64: 1>, scalar_prefetch = 0 : i64, scratch_operands = 0 : i64, tpu.core_type = #tpu.core_type<tc>, window_params = [{transform_indices = @transform_0, window_bounds = array<i64: 256, 64>}, {pipeline_mode = #tpu.pipeline_mode<synchronous>, transform_indices = @transform_1, window_bounds = array<i64: 64, 32>}, {pipeline_mode = #tpu.pipeline_mode<synchronous>, transform_indices = @transform_2, window_bounds = array<i64: 1, 32>}, {pipeline_mode = #tpu.pipeline_mode<synchronous>, transform_indices = @transform_3, window_bounds = array<i64: 32, 32>}, {pipeline_mode = #tpu.pipeline_mode<synchronous>, transform_indices = @transform_4, window_bounds = array<i64: 1, 32>}, {pipeline_mode = #tpu.pipeline_mode<synchronous>, transform_indices = @transform_5, window_bounds = array<i64: 32, 2>}, {pipeline_mode = #tpu.pipeline_mode<synchronous>, transform_indices = @transform_6, window_bounds = array<i64: 1, 2>}, {transform_indices = @transform_7, window_bounds = array<i64: 256, 2>}]} {
    %c0 = arith.constant 0 : index
    %c0_0 = arith.constant 0 : index
    %0 = vector.load %arg1[%c0, %c0_0] : memref<256x64xf32, #tpu.memory_space<vmem>>, vector<256x64xf32>
    %1 = arith.truncf %0 : vector<256x64xf32> to vector<256x64xbf16>
    %c0_1 = arith.constant 0 : index
    %c0_2 = arith.constant 0 : index
    %2 = vector.load %arg2[%c0_1, %c0_2] : memref<64x32xbf16, #tpu.memory_space<vmem>>, vector<64x32xbf16>
    %c0_3 = arith.constant 0 : index
    %c0_4 = arith.constant 0 : index
    %3 = vector.load %arg3[%c0_3, %c0_4] : memref<1x32xf32, #tpu.memory_space<vmem>>, vector<1x32xf32>
    %cst = arith.constant dense<0.000000e+00> : vector<256x32xf32>
    %4 = tpu.matmul %1, %2, %cst {dimension_numbers = #tpu.dot_dimension_numbers<[1], [0], [0], [1], [0, 0, 1, 1], [], []>} : vector<256x64xbf16>, vector<64x32xbf16>, vector<256x32xf32> -> vector<256x32xf32>
    %5 = vector.broadcast %3 : vector<1x32xf32> to vector<256x32xf32>
    %6 = arith.addf %4, %5 : vector<256x32xf32>
    %7 = math.tanh %6 : vector<256x32xf32>
    %8 = arith.truncf %7 : vector<256x32xf32> to vector<256x32xbf16>
    %c0_5 = arith.constant 0 : index
    %c0_6 = arith.constant 0 : index
    %9 = vector.load %arg4[%c0_5, %c0_6] : memref<32x32xbf16, #tpu.memory_space<vmem>>, vector<32x32xbf16>
    %c0_7 = arith.constant 0 : index
    %c0_8 = arith.constant 0 : index
    %10 = vector.load %arg5[%c0_7, %c0_8] : memref<1x32xf32, #tpu.memory_space<vmem>>, vector<1x32xf32>
    %cst_9 = arith.constant dense<0.000000e+00> : vector<256x32xf32>
    %11 = tpu.matmul %8, %9, %cst_9 {dimension_numbers = #tpu.dot_dimension_numbers<[1], [0], [0], [1], [0, 0, 1, 1], [], []>} : vector<256x32xbf16>, vector<32x32xbf16>, vector<256x32xf32> -> vector<256x32xf32>
    %12 = vector.broadcast %10 : vector<1x32xf32> to vector<256x32xf32>
    %13 = arith.addf %11, %12 : vector<256x32xf32>
    %14 = math.tanh %13 : vector<256x32xf32>
    %15 = arith.truncf %14 : vector<256x32xf32> to vector<256x32xbf16>
    %c0_10 = arith.constant 0 : index
    %c0_11 = arith.constant 0 : index
    %16 = vector.load %arg6[%c0_10, %c0_11] : memref<32x2xbf16, #tpu.memory_space<vmem>>, vector<32x2xbf16>
    %c0_12 = arith.constant 0 : index
    %c0_13 = arith.constant 0 : index
    %17 = vector.load %arg7[%c0_12, %c0_13] : memref<1x2xf32, #tpu.memory_space<vmem>>, vector<1x2xf32>
    %cst_14 = arith.constant dense<0.000000e+00> : vector<256x2xf32>
    %18 = tpu.matmul %15, %16, %cst_14 {dimension_numbers = #tpu.dot_dimension_numbers<[1], [0], [0], [1], [0, 0, 1, 1], [], []>} : vector<256x32xbf16>, vector<32x2xbf16>, vector<256x2xf32> -> vector<256x2xf32>
    %19 = vector.broadcast %17 : vector<1x2xf32> to vector<256x2xf32>
    %20 = arith.addf %18, %19 : vector<256x2xf32>
    %c0_15 = arith.constant 0 : index
    %c0_16 = arith.constant 0 : index
    %21 = vector.load %arg8[%c0_15, %c0_16] : memref<256x2xf32, #tpu.memory_space<vmem>>, vector<256x2xf32>
    tpu.vector_store %arg8[%c0_15, %c0_16], %20 {strides = array<i32>} : memref<256x2xf32, #tpu.memory_space<vmem>>, vector<256x2xf32>,
    return
  }
  func.func @transform_0(%arg0: i32) -> (i32, i32) {
    %c0_i32 = arith.constant 0 : i32
    %c0_i32_0 = arith.constant 0 : i32
    return %arg0, %c0_i32 : i32, i32
  }
  func.func @transform_1(%arg0: i32) -> (i32, i32) {
    %c0_i32 = arith.constant 0 : i32
    %c0_i32_0 = arith.constant 0 : i32
    %c0_i32_1 = arith.constant 0 : i32
    return %c0_i32, %c0_i32_0 : i32, i32
  }
  func.func @transform_2(%arg0: i32) -> (i32, i32) {
    %c0_i32 = arith.constant 0 : i32
    %c0_i32_0 = arith.constant 0 : i32
    %c0_i32_1 = arith.constant 0 : i32
    return %c0_i32, %c0_i32_0 : i32, i32
  }
  func.func @transform_3(%arg0: i32) -> (i32, i32) {
    %c0_i32 = arith.constant 0 : i32
    %c0_i32_0 = arith.constant 0 : i32
    %c0_i32_1 = arith.constant 0 : i32
    return %c0_i32, %c0_i32_0 : i32, i32
  }
  func.func @transform_4(%arg0: i32) -> (i32, i32) {
    %c0_i32 = arith.constant 0 : i32
    %c0_i32_0 = arith.constant 0 : i32
    %c0_i32_1 = arith.constant 0 : i32
    return %c0_i32, %c0_i32_0 : i32, i32
  }
  func.func @transform_5(%arg0: i32) -> (i32, i32) {
    %c0_i32 = arith.constant 0 : i32
    %c0_i32_0 = arith.constant 0 : i32
    %c0_i32_1 = arith.constant 0 : i32
    return %c0_i32, %c0_i32_0 : i32, i32
  }
  func.func @transform_6(%arg0: i32) -> (i32, i32) {
    %c0_i32 = arith.constant 0 : i32
    %c0_i32_0 = arith.constant 0 : i32
    %c0_i32_1 = arith.constant 0 : i32
    return %c0_i32, %c0_i32_0 : i32, i32
  }
  func.func @transform_7(%arg0: i32) -> (i32, i32) {
    %c0_i32 = arith.constant 0 : i32
    %c0_i32_0 = arith.constant 0 : i32
    return %arg0, %c0_i32 : i32, i32
  }
}

</mosaic_0001>

<llo_original>
// kernel: estimator_forward.1
$region0: #{estimator_forward.1}
  #allocation0 [shape = 'u32[]', space=smem, size = 0x4, offset = 0x4, fixed_abs, tag = 'smem constant byte address 0x4 - core index']
  #allocation1 [shape = 'u32[144,128]{1,0:T(1,128)}', space=vmem, size = 0x12000, scoped, tag = 'internal scratch']
  %s0 = inlined_call_operand.vmem [shape: f32[256,64], index: 0, kind: input, shape index: {}]
  %s1 = inlined_call_operand.vmem [shape: bf16[64,32], index: 1, kind: input, shape index: {}]
  %s2 = inlined_call_operand.vmem [shape: f32[1,32], index: 2, kind: input, shape index: {}]
  %s3 = inlined_call_operand.vmem [shape: bf16[32,32], index: 3, kind: input, shape index: {}]
  %s4 = inlined_call_operand.vmem [shape: f32[1,32], index: 4, kind: input, shape index: {}]
  %s5 = inlined_call_operand.vmem [shape: bf16[32,2], index: 5, kind: input, shape index: {}]
  %s6 = inlined_call_operand.vmem [shape: f32[1,2], index: 6, kind: input, shape index: {}]
  %s7 = inlined_call_operand.vmem [shape: f32[256,2], index: 7, kind: output, shape index: {}]
  %s8 = sld [smem:[#allocation0]]
  $region38: #{estimator_forward.1} parent=0
    _
  %s10 = ssub.s32 1, %s8
  %s11 = scalar_select 0, %s10, %s8
  // Predicated region
  $region2: #{estimator_forward.1} parent=0 // pred_check
    _
  $region3: #{estimator_forward.1} parent=0 // pred_check_branch
    %13 = sbr.rel (0) target = $region5
  $region4: #{estimator_forward.1} parent=0 // pred_region
    _
  $region5: #{estimator_forward.1} parent=0 // pred_fallthru
    _
  // Predicated region
  $region6: #{estimator_forward.1} parent=0 // pred_check
    _
  $region7: #{estimator_forward.1} parent=0 // pred_check_branch
    %15 = sbr.rel (0) target = $region9
  $region8: #{estimator_forward.1} parent=0 // pred_region
    _
  $region9: #{estimator_forward.1} parent=0 // pred_fallthru
    _
  // Predicated region
  $region10: #{estimator_forward.1} parent=0 // pred_check
    _
  $region11: #{estimator_forward.1} parent=0 // pred_check_branch
    %17 = sbr.rel (0) target = $region13
  $region12: #{estimator_forward.1} parent=0 // pred_region
    _
  $region13: #{estimator_forward.1} parent=0 // pred_fallthru
    _
  // Predicated region
  $region14: #{estimator_forward.1} parent=0 // pred_check
    _
  $region15: #{estimator_forward.1} parent=0 // pred_check_branch
    %19 = sbr.rel (0) target = $region17
  $region16: #{estimator_forward.1} parent=0 // pred_region
    _
  $region17: #{estimator_forward.1} parent=0 // pred_fallthru
    _
  // Predicated region
  $region18: #{estimator_forward.1} parent=0 // pred_check
    _
  $region19: #{estimator_forward.1} parent=0 // pred_check_branch
    %21 = sbr.rel (0) target = $region21
  $region20: #{estimator_forward.1} parent=0 // pred_region
    _
  $region21: #{estimator_forward.1} parent=0 // pred_fallthru
    _
  // Predicated region
  $region22: #{estimator_forward.1} parent=0 // pred_check
    _
  $region23: #{estimator_forward.1} parent=0 // pred_check_branch
    %23 = sbr.rel (0) target = $region25
  $region24: #{estimator_forward.1} parent=0 // pred_region
    _
  $region25: #{estimator_forward.1} parent=0 // pred_fallthru
    _
  // Predicated region
  $region26: #{estimator_forward.1} parent=0 // pred_check
    _
  $region27: #{estimator_forward.1} parent=0 // pred_check_branch
    %25 = sbr.rel (0) target = $region29
  $region28: #{estimator_forward.1} parent=0 // pred_region
    _
  $region29: #{estimator_forward.1} parent=0 // pred_fallthru
    _
  %v27 = vld [vmem:[%s0] sm:$0xff]
  %v28 = vld [vmem:[%s0 + $0x8] sm:$0xff]
  %v29 = vld [vmem:[%s0 + $0x10] sm:$0xff]
  %v30 = vld [vmem:[%s0 + $0x18] sm:$0xff]
  %v31 = vld [vmem:[%s0 + $0x20] sm:$0xff]
  %v32 = vld [vmem:[%s0 + $0x28] sm:$0xff]
  %v33 = vld [vmem:[%s0 + $0x30] sm:$0xff]
  %v34 = vld [vmem:[%s0 + $0x38] sm:$0xff]
  %v35 = vld [vmem:[%s0 + $0x40] sm:$0xff]
  %v36 = vld [vmem:[%s0 + $0x48] sm:$0xff]
  %v37 = vld [vmem:[%s0 + $0x50] sm:$0xff]
  %v38 = vld [vmem:[%s0 + $0x58] sm:$0xff]
  %v39 = vld [vmem:[%s0 + $0x60] sm:$0xff]
  %v40 = vld [vmem:[%s0 + $0x68] sm:$0xff]
  %v41 = vld [vmem:[%s0 + $0x70] sm:$0xff]
  %v42 = vld [vmem:[%s0 + $0x78] sm:$0xff]
  %v43 = vld [vmem:[%s0 + $0x80] sm:$0xff]
  %v44 = vld [vmem:[%s0 + $0x88] sm:$0xff]
  %v45 = vld [vmem:[%s0 + $0x90] sm:$0xff]
  %v46 = vld [vmem:[%s0 + $0x98] sm:$0xff]
  %v47 = vld [vmem:[%s0 + $0xa0] sm:$0xff]
  %v48 = vld [vmem:[%s0 + $0xa8] sm:$0xff]
  %v49 = vld [vmem:[%s0 + $0xb0] sm:$0xff]
  %v50 = vld [vmem:[%s0 + $0xb8] sm:$0xff]
  %v51 = vld [vmem:[%s0 + $0xc0] sm:$0xff]
  %v52 = vld [vmem:[%s0 + $0xc8] sm:$0xff]
  %v53 = vld [vmem:[%s0 + $0xd0] sm:$0xff]
  %v54 = vld [vmem:[%s0 + $0xd8] sm:$0xff]
  %v55 = vld [vmem:[%s0 + $0xe0] sm:$0xff]
  %v56 = vld [vmem:[%s0 + $0xe8] sm:$0xff]
  %v57 = vld [vmem:[%s0 + $0xf0] sm:$0xff]
  %v58 = vld [vmem:[%s0 + $0xf8] sm:$0xff]
  %v59 = vpack.c.bf16 %v28, %v27
  %v60 = vpack.c.bf16 %v30, %v29
  %v61 = vpack.c.bf16 %v32, %v31
  %v62 = vpack.c.bf16 %v34, %v33
  %v63 = vpack.c.bf16 %v36, %v35
  %v64 = vpack.c.bf16 %v38, %v37
  %v65 = vpack.c.bf16 %v40, %v39
  %v66 = vpack.c.bf16 %v42, %v41
  %v67 = vpack.c.bf16 %v44, %v43
  %v68 = vpack.c.bf16 %v46, %v45
  %v69 = vpack.c.bf16 %v48, %v47
  %v70 = vpack.c.bf16 %v50, %v49
  %v71 = vpack.c.bf16 %v52, %v51
  %v72 = vpack.c.bf16 %v54, %v53
  %v73 = vpack.c.bf16 %v56, %v55
  %v74 = vpack.c.bf16 %v58, %v57
  %v75 = vld [vmem:[%s1] sm:$0xf]
  %v76 = vld [vmem:[%s1 + $0x4] sm:$0xf]
  %v77 = vld [vmem:[%s1 + $0x8] sm:$0xf]
  %v78 = vld [vmem:[%s1 + $0xc] sm:$0xf]
  %v79 = vld [vmem:[%s1 + $0x10] sm:$0xf]
  %v80 = vld [vmem:[%s1 + $0x14] sm:$0xf]
  %v81 = vld [vmem:[%s1 + $0x18] sm:$0xf]
  %v82 = vld [vmem:[%s1 + $0x1c] sm:$0xf]
  %v83 = vld [vmem:[%s2] sm:$0x1]
  %v85 = vlaneseq
  %v86 = vshrl.u32 %v85, 7
  %v87 = vsub.s32 0, %v86
  %v88 = vrot.slane %v83, %v87
  %v98 = vunpack.c.l.b16 %v75
  %v99 = vunpack.c.l.b16 %v76
  %v100 = vunpack.c.l.b16 %v77
  %v101 = vunpack.c.l.b16 %v78
  %v102 = vunpack.c.l.b16 %v79
  %v103 = vunpack.c.l.b16 %v80
  %v104 = vunpack.c.l.b16 %v81
  %v105 = vunpack.c.l.b16 %v82
  %v106 = vpack.c.b16 %v99, %v98
  %v107 = vpack.c.b16 %v101, %v100
  %v108 = vpack.c.b16 %v103, %v102
  %v109 = vpack.c.b16 %v105, %v104
  %vm114 = vcmask 523264
  %v116 = vsel %vm114, %v59, 0
  %v119 = vsel %vm114, %v60, 0
  %v122 = vsel %vm114, %v61, 0
  %v125 = vsel %vm114, %v62, 0
  %v128 = vsel %vm114, %v63, 0
  %v131 = vsel %vm114, %v64, 0
  %v134 = vsel %vm114, %v65, 0
  %v137 = vsel %vm114, %v66, 0
  %v140 = vsel %vm114, %v67, 0
  %v143 = vsel %vm114, %v68, 0
  %v146 = vsel %vm114, %v69, 0
  %v149 = vsel %vm114, %v70, 0
  %v152 = vsel %vm114, %v71, 0
  %v155 = vsel %vm114, %v72, 0
  %v158 = vsel %vm114, %v73, 0
  %v161 = vsel %vm114, %v74, 0
  %163 = vmatprep.subr.bf16.mxu0 0
  %164 = vmatpush1.bf16.msra.mxu0 %v106
  %165 = vmatprep.subr.bf16.mxu0 0
  %166 = vmatpush1.bf16.msra.mxu0 %v107
  %167 = vmatprep.subr.bf16.mxu0 0
  %168 = vmatpush1.bf16.msra.mxu0 %v108
  %169 = vmatprep.subr.bf16.mxu0 0
  %170 = vmatpush1.bf16.msra.mxu0 %v109
  %171 = vmatprep.subr.bf16.mxu0 0
  %172 = vmatpush1.bf16.msra.mxu0 0
  %173 = vmatprep.subr.bf16.mxu0 0
  %174 = vmatpush1.bf16.msra.mxu0 0
  %175 = vmatprep.subr.bf16.mxu0 0
  %176 = vmatpush1.bf16.msra.mxu0 0
  %177 = vmatprep.subr.bf16.mxu0 0
  %178 = vmatpush1.bf16.msra.mxu0 0
  %179 = vmatprep.subr.bf16.mxu0 0
  %180 = vmatpush1.bf16.msra.mxu0 0
  %181 = vmatprep.subr.bf16.mxu0 0
  %182 = vmatpush1.bf16.msra.mxu0 0
  %183 = vmatprep.subr.bf16.mxu0 0
  %184 = vmatpush1.bf16.msra.mxu0 0
  %185 = vmatprep.subr.bf16.mxu0 0
  %186 = vmatpush1.bf16.msra.mxu0 0
  %187 = vmatprep.subr.bf16.mxu0 0
  %188 = vmatpush1.bf16.msra.mxu0 0
  %189 = vmatprep.subr.bf16.mxu0 0
  %190 = vmatpush1.bf16.msra.mxu0 0
  %191 = vmatprep.subr.bf16.mxu0 0
  %192 = vmatpush1.bf16.msra.mxu0 0
  %193 = vmatprep.subr.bf16.mxu0 0
  %194 = vmatpush1.bf16.msra.mxu0 0
  %195 = vmatprep.mubr.bf16.mxu0 0
  %196 = vmatmul.mubr.bf16.gmra.mrb[0].mxu0 %v116
  %v197 = vpop.f32.mrb[0].mxu0
  %v198 = vadd.f32 %v88, %v197
  %v199 = vpop.f32.mrb[0].mxu0
  %v200 = vpop.f32.mrb[0].mxu0
  %v201 = vadd.f32 %v88, %v200
  %v202 = vpop.f32.mrb[0].mxu0
  %203 = vmatprep.mubr.bf16.mxu0 0
  %204 = vmatmul.mubr.bf16.gmra.mrb[0].mxu0 %v119
  %v205 = vpop.f32.mrb[0].mxu0
  %v206 = vadd.f32 %v88, %v205
  %v207 = vpop.f32.mrb[0].mxu0
  %v208 = vpop.f32.mrb[0].mxu0
  %v209 = vadd.f32 %v88, %v208
  %v210 = vpop.f32.mrb[0].mxu0
  %211 = vmatprep.mubr.bf16.mxu0 0
  %212 = vmatmul.mubr.bf16.gmra.mrb[0].mxu0 %v122
  %v213 = vpop.f32.mrb[0].mxu0
  %v214 = vadd.f32 %v88, %v213
  %v215 = vpop.f32.mrb[0].mxu0
  %v216 = vpop.f32.mrb[0].mxu0
  %v217 = vadd.f32 %v88, %v216
  %v218 = vpop.f32.mrb[0].mxu0
  %219 = vmatprep.mubr.bf16.mxu0 0
  %220 = vmatmul.mubr.bf16.gmra.mrb[0].mxu0 %v125
  %v221 = vpop.f32.mrb[0].mxu0
  %v222 = vadd.f32 %v88, %v221
  %v223 = vpop.f32.mrb[0].mxu0
  %v224 = vpop.f32.mrb[0].mxu0
  %v225 = vadd.f32 %v88, %v224
  %v226 = vpop.f32.mrb[0].mxu0
  %227 = vmatprep.mubr.bf16.mxu0 0
  %228 = vmatmul.mubr.bf16.gmra.mrb[0].mxu0 %v128
  %v229 = vpop.f32.mrb[0].mxu0
  %v230 = vadd.f32 %v88, %v229
  %v231 = vpop.f32.mrb[0].mxu0
  %v232 = vpop.f32.mrb[0].mxu0
  %v233 = vadd.f32 %v88, %v232
  %v234 = vpop.f32.mrb[0].mxu0
  %235 = vmatprep.mubr.bf16.mxu0 0
  %236 = vmatmul.mubr.bf16.gmra.mrb[0].mxu0 %v131
  %v237 = vpop.f32.mrb[0].mxu0
  %v238 = vadd.f32 %v88, %v237
  %v239 = vpop.f32.mrb[0].mxu0
  %v240 = vpop.f32.mrb[0].mxu0
  %v241 = vadd.f32 %v88, %v240
  %v242 = vpop.f32.mrb[0].mxu0
  %243 = vmatprep.mubr.bf16.mxu0 0
  %244 = vmatmul.mubr.bf16.gmra.mrb[0].mxu0 %v134
  %v245 = vpop.f32.mrb[0].mxu0
  %v246 = vadd.f32 %v88, %v245
  %v247 = vpop.f32.mrb[0].mxu0
  %v248 = vpop.f32.mrb[0].mxu0
  %v249 = vadd.f32 %v88, %v248
  %v250 = vpop.f32.mrb[0].mxu0
  %251 = vmatprep.mubr.bf16.mxu0 0
  %252 = vmatmul.mubr.bf16.gmra.mrb[0].mxu0 %v137
  %v253 = vpop.f32.mrb[0].mxu0
  %v254 = vadd.f32 %v88, %v253
  %v255 = vpop.f32.mrb[0].mxu0
  %v256 = vpop.f32.mrb[0].mxu0
  %v257 = vadd.f32 %v88, %v256
  %v258 = vpop.f32.mrb[0].mxu0
  %259 = vmatprep.mubr.bf16.mxu0 0
  %260 = vmatmul.mubr.bf16.gmra.mrb[0].mxu0 %v140
  %v261 = vpop.f32.mrb[0].mxu0
  %v262 = vadd.f32 %v88, %v261
  %v263 = vpop.f32.mrb[0].mxu0
  %v264 = vpop.f32.mrb[0].mxu0
  %v265 = vadd.f32 %v88, %v264
  %v266 = vpop.f32.mrb[0].mxu0
  %267 = vmatprep.mubr.bf16.mxu0 0
  %268 = vmatmul.mubr.bf16.gmra.mrb[0].mxu0 %v143
  %v269 = vpop.f32.mrb[0].mxu0
  %v270 = vadd.f32 %v88, %v269
  %v271 = vpop.f32.mrb[0].mxu0
  %v272 = vpop.f32.mrb[0].mxu0
  %v273 = vadd.f32 %v88, %v272
  %v274 = vpop.f32.mrb[0].mxu0
  %275 = vmatprep.mubr.bf16.mxu0 0
  %276 = vmatmul.mubr.bf16.gmra.mrb[0].mxu0 %v146
  %v277 = vpop.f32.mrb[0].mxu0
  %v278 = vadd.f32 %v88, %v277
  %v279 = vpop.f32.mrb[0].mxu0
  %v280 = vpop.f32.mrb[0].mxu0
  %v281 = vadd.f32 %v88, %v280
  %v282 = vpop.f32.mrb[0].mxu0
  %283 = vmatprep.mubr.bf16.mxu0 0
  %284 = vmatmul.mubr.bf16.gmra.mrb[0].mxu0 %v149
  %v285 = vpop.f32.mrb[0].mxu0
  %v286 = vadd.f32 %v88, %v285
  %v287 = vpop.f32.mrb[0].mxu0
  %v288 = vpop.f32.mrb[0].mxu0
  %v289 = vadd.f32 %v88, %v288
  %v290 = vpop.f32.mrb[0].mxu0
  %291 = vmatprep.mubr.bf16.mxu0 0
  %292 = vmatmul.mubr.bf16.gmra.mrb[0].mxu0 %v152
  %v293 = vpop.f32.mrb[0].mxu0
  %v294 = vadd.f32 %v88, %v293
  %v295 = vpop.f32.mrb[0].mxu0
  %v296 = vpop.f32.mrb[0].mxu0
  %v297 = vadd.f32 %v88, %v296
  %v298 = vpop.f32.mrb[0].mxu0
  %299 = vmatprep.mubr.bf16.mxu0 0
  %300 = vmatmul.mubr.bf16.gmra.mrb[0].mxu0 %v155
  %v301 = vpop.f32.mrb[0].mxu0
  %v302 = vadd.f32 %v88, %v301
  %v303 = vpop.f32.mrb[0].mxu0
  %v304 = vpop.f32.mrb[0].mxu0
  %v305 = vadd.f32 %v88, %v304
  %v306 = vpop.f32.mrb[0].mxu0
  %307 = vmatprep.mubr.bf16.mxu0 0
  %308 = vmatmul.mubr.bf16.gmra.mrb[0].mxu0 %v158
  %v309 = vpop.f32.mrb[0].mxu0
  %v310 = vadd.f32 %v88, %v309
  %v311 = vpop.f32.mrb[0].mxu0
  %v312 = vpop.f32.mrb[0].mxu0
  %v313 = vadd.f32 %v88, %v312
  %v314 = vpop.f32.mrb[0].mxu0
  %315 = vmatprep.mubr.bf16.mxu0 0
  %316 = vmatmul.mubr.bf16.gmra.mrb[0].mxu0 %v161
  %v317 = vpop.f32.mrb[0].mxu0
  %v318 = vadd.f32 %v88, %v317
  %v319 = vpop.f32.mrb[0].mxu0
  %v320 = vpop.f32.mrb[0].mxu0
  %v321 = vadd.f32 %v88, %v320
  %v322 = vpop.f32.mrb[0].mxu0
  %323 = vdwg.mxu0
  %v324 = vtanh.pop %v198
  %v325 = vtanh.pop %v201
  %v326 = vtanh.pop %v206
  %v327 = vtanh.pop %v209
  %v328 = vtanh.pop %v214
  %v329 = vtanh.pop %v217
  %v330 = vtanh.pop %v222
  %v331 = vtanh.pop %v225
  %v332 = vtanh.pop %v230
  %v333 = vtanh.pop %v233
  %v334 = vtanh.pop %v238
  %v335 = vtanh.pop %v241
  %v336 = vtanh.pop %v246
  %v337 = vtanh.pop %v249
  %v338 = vtanh.pop %v254
  %v339 = vtanh.pop %v257
  %v340 = vtanh.pop %v262
  %v341 = vtanh.pop %v265
  %v342 = vtanh.pop %v270
  %v343 = vtanh.pop %v273
  %v344 = vtanh.pop %v278
  %v345 = vtanh.pop %v281
  %v346 = vtanh.pop %v286
  %v347 = vtanh.pop %v289
  %v348 = vtanh.pop %v294
  %v349 = vtanh.pop %v297
  %v350 = vtanh.pop %v302
  %v351 = vtanh.pop %v305
  %v352 = vtanh.pop %v310
  %v353 = vtanh.pop %v313
  %v354 = vtanh.pop %v318
  %v355 = vtanh.pop %v321
  %v356 = vpack.c.bf16 %v325, %v324
  %v357 = vpack.c.bf16 %v327, %v326
  %v358 = vpack.c.bf16 %v329, %v328
  %v359 = vpack.c.bf16 %v331, %v330
  %v360 = vpack.c.bf16 %v333, %v332
  %v361 = vpack.c.bf16 %v335, %v334
  %v362 = vpack.c.bf16 %v337, %v336
  %v363 = vpack.c.bf16 %v339, %v338
  %v364 = vpack.c.bf16 %v341, %v340
  %v365 = vpack.c.bf16 %v343, %v342
  %v366 = vpack.c.bf16 %v345, %v344
  %v367 = vpack.c.bf16 %v347, %v346
  %v368 = vpack.c.bf16 %v349, %v348
  %v369 = vpack.c.bf16 %v351, %v350
  %v370 = vpack.c.bf16 %v353, %v352
  %v371 = vpack.c.bf16 %v355, %v354
  %v372 = vld [vmem:[%s3] sm:$0xf]
  %v373 = vld [vmem:[%s3 + $0x4] sm:$0xf]
  %v374 = vld [vmem:[%s3 + $0x8] sm:$0xf]
  %v375 = vld [vmem:[%s3 + $0xc] sm:$0xf]
  %v376 = vld [vmem:[%s4] sm:$0x1]
  %v378 = vlaneseq
  %v379 = vshrl.u32 %v378, 7
  %v380 = vsub.s32 0, %v379
  %v381 = vrot.slane %v376, %v380
  %v387 = vunpack.c.l.b16 %v372
  %v388 = vunpack.c.l.b16 %v373
  %v389 = vunpack.c.l.b16 %v374
  %v390 = vunpack.c.l.b16 %v375
  %v391 = vpack.c.b16 %v388, %v387
  %v392 = vpack.c.b16 %v390, %v389
  %vm395 = vcmask 261120
  %v397 = vsel %vm395, %v356, 0
  %v400 = vsel %vm395, %v357, 0
  %v403 = vsel %vm395, %v358, 0
  %v406 = vsel %vm395, %v359, 0
  %v409 = vsel %vm395, %v360, 0
  %v412 = vsel %vm395, %v361, 0
  %v415 = vsel %vm395, %v362, 0
  %v418 = vsel %vm395, %v363, 0
  %v421 = vsel %vm395, %v364, 0
  %v424 = vsel %vm395, %v365, 0
  %v427 = vsel %vm395, %v366, 0
  %v430 = vsel %vm395, %v367, 0
  %v433 = vsel %vm395, %v368, 0
  %v436 = vsel %vm395, %v369, 0
  %v439 = vsel %vm395, %v370, 0
  %v442 = vsel %vm395, %v371, 0
  %444 = vmatprep.subr.bf16.mxu0 0
  %445 = vmatpush1.bf16.msra.mxu0 %v391
  %446 = vmatprep.subr.bf16.mxu0 0
  %447 = vmatpush1.bf16.msra.mxu0 %v392
  %448 = vmatprep.subr.bf16.mxu0 0
  %449 = vmatpush1.bf16.msra.mxu0 0
  %450 = vmatprep.subr.bf16.mxu0 0
  %451 = vmatpush1.bf16.msra.mxu0 0
  %452 = vmatprep.subr.bf16.mxu0 0
  %453 = vmatpush1.bf16.msra.mxu0 0
  %454 = vmatprep.subr.bf16.mxu0 0
  %455 = vmatpush1.bf16.msra.mxu0 0
  %456 = vmatprep.subr.bf16.mxu0 0
  %457 = vmatpush1.bf16.msra.mxu0 0
  %458 = vmatprep.subr.bf16.mxu0 0
  %459 = vmatpush1.bf16.msra.mxu0 0
  %460 = vmatprep.subr.bf16.mxu0 0
  %461 = vmatpush1.bf16.msra.mxu0 0
  %462 = vmatprep.subr.bf16.mxu0 0
  %463 = vmatpush1.bf16.msra.mxu0 0
  %464 = vmatprep.subr.bf16.mxu0 0
  %465 = vmatpush1.bf16.msra.mxu0 0
  %466 = vmatprep.subr.bf16.mxu0 0
  %467 = vmatpush1.bf16.msra.mxu0 0
  %468 = vmatprep.subr.bf16.mxu0 0
  %469 = vmatpush1.bf16.msra.mxu0 0
  %470 = vmatprep.subr.bf16.mxu0 0
  %471 = vmatpush1.bf16.msra.mxu0 0
  %472 = vmatprep.subr.bf16.mxu0 0
  %473 = vmatpush1.bf16.msra.mxu0 0
  %474 = vmatprep.subr.bf16.mxu0 0
  %475 = vmatpush1.bf16.msra.mxu0 0
  %476 = vmatprep.mubr.bf16.mxu0 0
  %477 = vmatmul.mubr.bf16.gmra.mrb[0].mxu0 %v397
  %v478 = vpop.f32.mrb[0].mxu0
  %v479 = vadd.f32 %v381, %v478
  %v480 = vpop.f32.mrb[0].mxu0
  %v481 = vpop.f32.mrb[0].mxu0
  %v482 = vadd.f32 %v381, %v481
  %v483 = vpop.f32.mrb[0].mxu0
  %484 = vmatprep.mubr.bf16.mxu0 0
  %485 = vmatmul.mubr.bf16.gmra.mrb[0].mxu0 %v400
  %v486 = vpop.f32.mrb[0].mxu0
  %v487 = vadd.f32 %v381, %v486
  %v488 = vpop.f32.mrb[0].mxu0
  %v489 = vpop.f32.mrb[0].mxu0
  %v490 = vadd.f32 %v381, %v489
  %v491 = vpop.f32.mrb[0].mxu0
  %492 = vmatprep.mubr.bf16.mxu0 0
  %493 = vmatmul.mubr.bf16.gmra.mrb[0].mxu0 %v403
  %v494 = vpop.f32.mrb[0].mxu0
  %v495 = vadd.f32 %v381, %v494
  %v496 = vpop.f32.mrb[0].mxu0
  %v497 = vpop.f32.mrb[0].mxu0
  %v498 = vadd.f32 %v381, %v497
  %v499 = vpop.f32.mrb[0].mxu0
  %500 = vmatprep.mubr.bf16.mxu0 0
  %501 = vmatmul.mubr.bf16.gmra.mrb[0].mxu0 %v406
  %v502 = vpop.f32.mrb[0].mxu0
  %v503 = vadd.f32 %v381, %v502
  %v504 = vpop.f32.mrb[0].mxu0
  %v505 = vpop.f32.mrb[0].mxu0
  %v506 = vadd.f32 %v381, %v505
  %v507 = vpop.f32.mrb[0].mxu0
  %508 = vmatprep.mubr.bf16.mxu0 0
  %509 = vmatmul.mubr.bf16.gmra.mrb[0].mxu0 %v409
  %v510 = vpop.f32.mrb[0].mxu0
  %v511 = vadd.f32 %v381, %v510
  %v512 = vpop.f32.mrb[0].mxu0
  %v513 = vpop.f32.mrb[0].mxu0
  %v514 = vadd.f32 %v381, %v513
  %v515 = vpop.f32.mrb[0].mxu0
  %516 = vmatprep.mubr.bf16.mxu0 0
  %517 = vmatmul.mubr.bf16.gmra.mrb[0].mxu0 %v412
  %v518 = vpop.f32.mrb[0].mxu0
  %v519 = vadd.f32 %v381, %v518
  %v520 = vpop.f32.mrb[0].mxu0
  %v521 = vpop.f32.mrb[0].mxu0
  %v522 = vadd.f32 %v381, %v521
  %v523 = vpop.f32.mrb[0].mxu0
  %524 = vmatprep.mubr.bf16.mxu0 0
  %525 = vmatmul.mubr.bf16.gmra.mrb[0].mxu0 %v415
  %v526 = vpop.f32.mrb[0].mxu0
  %v527 = vadd.f32 %v381, %v526
  %v528 = vpop.f32.mrb[0].mxu0
  %v529 = vpop.f32.mrb[0].mxu0
  %v530 = vadd.f32 %v381, %v529
  %v531 = vpop.f32.mrb[0].mxu0
  %532 = vmatprep.mubr.bf16.mxu0 0
  %533 = vmatmul.mubr.bf16.gmra.mrb[0].mxu0 %v418
  %v534 = vpop.f32.mrb[0].mxu0
  %v535 = vadd.f32 %v381, %v534
  %v536 = vpop.f32.mrb[0].mxu0
  %v537 = vpop.f32.mrb[0].mxu0
  %v538 = vadd.f32 %v381, %v537
  %v539 = vpop.f32.mrb[0].mxu0
  %540 = vmatprep.mubr.bf16.mxu0 0
  %541 = vmatmul.mubr.bf16.gmra.mrb[0].mxu0 %v421
  %v542 = vpop.f32.mrb[0].mxu0
  %v543 = vadd.f32 %v381, %v542
  %v544 = vpop.f32.mrb[0].mxu0
  %v545 = vpop.f32.mrb[0].mxu0
  %v546 = vadd.f32 %v381, %v545
  %v547 = vpop.f32.mrb[0].mxu0
  %548 = vmatprep.mubr.bf16.mxu0 0
  %549 = vmatmul.mubr.bf16.gmra.mrb[0].mxu0 %v424
  %v550 = vpop.f32.mrb[0].mxu0
  %v551 = vadd.f32 %v381, %v550
  %v552 = vpop.f32.mrb[0].mxu0
  %v553 = vpop.f32.mrb[0].mxu0
  %v554 = vadd.f32 %v381, %v553
  %v555 = vpop.f32.mrb[0].mxu0
  %556 = vmatprep.mubr.bf16.mxu0 0
  %557 = vmatmul.mubr.bf16.gmra.mrb[0].mxu0 %v427
  %v558 = vpop.f32.mrb[0].mxu0
  %v559 = vadd.f32 %v381, %v558
  %v560 = vpop.f32.mrb[0].mxu0
  %v561 = vpop.f32.mrb[0].mxu0
  %v562 = vadd.f32 %v381, %v561
  %v563 = vpop.f32.mrb[0].mxu0
  %564 = vmatprep.mubr.bf16.mxu0 0
  %565 = vmatmul.mubr.bf16.gmra.mrb[0].mxu0 %v430
  %v566 = vpop.f32.mrb[0].mxu0
  %v567 = vadd.f32 %v381, %v566
  %v568 = vpop.f32.mrb[0].mxu0
  %v569 = vpop.f32.mrb[0].mxu0
  %v570 = vadd.f32 %v381, %v569
  %v571 = vpop.f32.mrb[0].mxu0
  %572 = vmatprep.mubr.bf16.mxu0 0
  %573 = vmatmul.mubr.bf16.gmra.mrb[0].mxu0 %v433
  %v574 = vpop.f32.mrb[0].mxu0
  %v575 = vadd.f32 %v381, %v574
  %v576 = vpop.f32.mrb[0].mxu0
  %v577 = vpop.f32.mrb[0].mxu0
  %v578 = vadd.f32 %v381, %v577
  %v579 = vpop.f32.mrb[0].mxu0
  %580 = vmatprep.mubr.bf16.mxu0 0
  %581 = vmatmul.mubr.bf16.gmra.mrb[0].mxu0 %v436
  %v582 = vpop.f32.mrb[0].mxu0
  %v583 = vadd.f32 %v381, %v582
  %v584 = vpop.f32.mrb[0].mxu0
  %v585 = vpop.f32.mrb[0].mxu0
  %v586 = vadd.f32 %v381, %v585
  %v587 = vpop.f32.mrb[0].mxu0
  %588 = vmatprep.mubr.bf16.mxu0 0
  %589 = vmatmul.mubr.bf16.gmra.mrb[0].mxu0 %v439
  %v590 = vpop.f32.mrb[0].mxu0
  %v591 = vadd.f32 %v381, %v590
  %v592 = vpop.f32.mrb[0].mxu0
  %v593 = vpop.f32.mrb[0].mxu0
  %v594 = vadd.f32 %v381, %v593
  %v595 = vpop.f32.mrb[0].mxu0
  %596 = vmatprep.mubr.bf16.mxu0 0
  %597 = vmatmul.mubr.bf16.gmra.mrb[0].mxu0 %v442
  %v598 = vpop.f32.mrb[0].mxu0
  %v599 = vadd.f32 %v381, %v598
  %v600 = vpop.f32.mrb[0].mxu0
  %v601 = vpop.f32.mrb[0].mxu0
  %v602 = vadd.f32 %v381, %v601
  %v603 = vpop.f32.mrb[0].mxu0
  %604 = vdwg.mxu0
  %v605 = vtanh.pop %v479
  %v606 = vtanh.pop %v482
  %v607 = vtanh.pop %v487
  %v608 = vtanh.pop %v490
  %v609 = vtanh.pop %v495
  %v610 = vtanh.pop %v498
  %v611 = vtanh.pop %v503
  %v612 = vtanh.pop %v506
  %v613 = vtanh.pop %v511
  %v614 = vtanh.pop %v514
  %v615 = vtanh.pop %v519
  %v616 = vtanh.pop %v522
  %v617 = vtanh.pop %v527
  %v618 = vtanh.pop %v530
  %v619 = vtanh.pop %v535
  %v620 = vtanh.pop %v538
  %v621 = vtanh.pop %v543
  %v622 = vtanh.pop %v546
  %v623 = vtanh.pop %v551
  %v624 = vtanh.pop %v554
  %v625 = vtanh.pop %v559
  %v626 = vtanh.pop %v562
  %v627 = vtanh.pop %v567
  %v628 = vtanh.pop %v570
  %v629 = vtanh.pop %v575
  %v630 = vtanh.pop %v578
  %v631 = vtanh.pop %v583
  %v632 = vtanh.pop %v586
  %v633 = vtanh.pop %v591
  %v634 = vtanh.pop %v594
  %v635 = vtanh.pop %v599
  %v636 = vtanh.pop %v602
  %v637 = vpack.c.bf16 %v606, %v605
  %v638 = vpack.c.bf16 %v608, %v607
  %v639 = vpack.c.bf16 %v610, %v609
  %v640 = vpack.c.bf16 %v612, %v611
  %v641 = vpack.c.bf16 %v614, %v613
  %v642 = vpack.c.bf16 %v616, %v615
  %v643 = vpack.c.bf16 %v618, %v617
  %v644 = vpack.c.bf16 %v620, %v619
  %v645 = vpack.c.bf16 %v622, %v621
  %v646 = vpack.c.bf16 %v624, %v623
  %v647 = vpack.c.bf16 %v626, %v625
  %v648 = vpack.c.bf16 %v628, %v627
  %v649 = vpack.c.bf16 %v630, %v629
  %v650 = vpack.c.bf16 %v632, %v631
  %v651 = vpack.c.bf16 %v634, %v633
  %v652 = vpack.c.bf16 %v636, %v635
  %v653 = vld [vmem:[%s5] sm:$0xf]
  %v654 = vld [vmem:[%s5 + $0x4] sm:$0xf]
  %v655 = vld [vmem:[%s5 + $0x8] sm:$0xf]
  %v656 = vld [vmem:[%s5 + $0xc] sm:$0xf]
  %v657 = vld [vmem:[%s6] sm:$0x1]
  %v659 = vlaneseq
  %v660 = vshrl.u32 %v659, 7
  %v661 = vsub.s32 0, %v660
  %v662 = vrot.slane %v657, %v661
  %v668 = vunpack.c.l.b16 %v653
  %v669 = vunpack.c.l.b16 %v654
  %v670 = vunpack.c.l.b16 %v655
  %v671 = vunpack.c.l.b16 %v656
  %v672 = vpack.c.b16 %v669, %v668
  %v673 = vpack.c.b16 %v671, %v670
  %v677 = vsel %vm395, %v637, 0
  %v680 = vsel %vm395, %v638, 0
  %v683 = vsel %vm395, %v639, 0
  %v686 = vsel %vm395, %v640, 0
  %v689 = vsel %vm395, %v641, 0
  %v692 = vsel %vm395, %v642, 0
  %v695 = vsel %vm395, %v643, 0
  %v698 = vsel %vm395, %v644, 0
  %v701 = vsel %vm395, %v645, 0
  %v704 = vsel %vm395, %v646, 0
  %v707 = vsel %vm395, %v647, 0
  %v710 = vsel %vm395, %v648, 0
  %v713 = vsel %vm395, %v649, 0
  %v716 = vsel %vm395, %v650, 0
  %v719 = vsel %vm395, %v651, 0
  %v722 = vsel %vm395, %v652, 0
  %724 = vmatprep.subr.bf16.mxu0 0
  %725 = vmatpush1.bf16.msra.mxu0 %v672
  %726 = vmatprep.subr.bf16.mxu0 0
  %727 = vmatpush1.bf16.msra.mxu0 %v673
  %728 = vmatprep.subr.bf16.mxu0 0
  %729 = vmatpush1.bf16.msra.mxu0 0
  %730 = vmatprep.subr.bf16.mxu0 0
  %731 = vmatpush1.bf16.msra.mxu0 0
  %732 = vmatprep.subr.bf16.mxu0 0
  %733 = vmatpush1.bf16.msra.mxu0 0
  %734 = vmatprep.subr.bf16.mxu0 0
  %735 = vmatpush1.bf16.msra.mxu0 0
  %736 = vmatprep.subr.bf16.mxu0 0
  %737 = vmatpush1.bf16.msra.mxu0 0
  %738 = vmatprep.subr.bf16.mxu0 0
  %739 = vmatpush1.bf16.msra.mxu0 0
  %740 = vmatprep.subr.bf16.mxu0 0
  %741 = vmatpush1.bf16.msra.mxu0 0
  %742 = vmatprep.subr.bf16.mxu0 0
  %743 = vmatpush1.bf16.msra.mxu0 0
  %744 = vmatprep.subr.bf16.mxu0 0
  %745 = vmatpush1.bf16.msra.mxu0 0
  %746 = vmatprep.subr.bf16.mxu0 0
  %747 = vmatpush1.bf16.msra.mxu0 0
  %748 = vmatprep.subr.bf16.mxu0 0
  %749 = vmatpush1.bf16.msra.mxu0 0
  %750 = vmatprep.subr.bf16.mxu0 0
  %751 = vmatpush1.bf16.msra.mxu0 0
  %752 = vmatprep.subr.bf16.mxu0 0
  %753 = vmatpush1.bf16.msra.mxu0 0
  %754 = vmatprep.subr.bf16.mxu0 0
  %755 = vmatpush1.bf16.msra.mxu0 0
  %756 = vmatprep.mubr.bf16.mxu0 0
  %757 = vmatmul.mubr.bf16.gmra.mrb[0].mxu0 %v677
  %v758 = vpop.f32.mrb[0].mxu0
  %v759 = vadd.f32 %v662, %v758
  %v760 = vpop.f32.mrb[0].mxu0
  %v761 = vpop.f32.mrb[0].mxu0
  %v762 = vadd.f32 %v662, %v761
  %v763 = vpop.f32.mrb[0].mxu0
  %764 = vmatprep.mubr.bf16.mxu0 0
  %765 = vmatmul.mubr.bf16.gmra.mrb[0].mxu0 %v680
  %v766 = vpop.f32.mrb[0].mxu0
  %v767 = vadd.f32 %v662, %v766
  %v768 = vpop.f32.mrb[0].mxu0
  %v769 = vpop.f32.mrb[0].mxu0
  %v770 = vadd.f32 %v662, %v769
  %v771 = vpop.f32.mrb[0].mxu0
  %772 = vmatprep.mubr.bf16.mxu0 0
  %773 = vmatmul.mubr.bf16.gmra.mrb[0].mxu0 %v683
  %v774 = vpop.f32.mrb[0].mxu0
  %v775 = vadd.f32 %v662, %v774
  %v776 = vpop.f32.mrb[0].mxu0
  %v777 = vpop.f32.mrb[0].mxu0
  %v778 = vadd.f32 %v662, %v777
  %v779 = vpop.f32.mrb[0].mxu0
  %780 = vmatprep.mubr.bf16.mxu0 0
  %781 = vmatmul.mubr.bf16.gmra.mrb[0].mxu0 %v686
  %v782 = vpop.f32.mrb[0].mxu0
  %v783 = vadd.f32 %v662, %v782
  %v784 = vpop.f32.mrb[0].mxu0
  %v785 = vpop.f32.mrb[0].mxu0
  %v786 = vadd.f32 %v662, %v785
  %v787 = vpop.f32.mrb[0].mxu0
  %788 = vmatprep.mubr.bf16.mxu0 0
  %789 = vmatmul.mubr.bf16.gmra.mrb[0].mxu0 %v689
  %v790 = vpop.f32.mrb[0].mxu0
  %v791 = vadd.f32 %v662, %v790
  %v792 = vpop.f32.mrb[0].mxu0
  %v793 = vpop.f32.mrb[0].mxu0
  %v794 = vadd.f32 %v662, %v793
  %v795 = vpop.f32.mrb[0].mxu0
  %796 = vmatprep.mubr.bf16.mxu0 0
  %797 = vmatmul.mubr.bf16.gmra.mrb[0].mxu0 %v692
  %v798 = vpop.f32.mrb[0].mxu0
  %v799 = vadd.f32 %v662, %v798
  %v800 = vpop.f32.mrb[0].mxu0
  %v801 = vpop.f32.mrb[0].mxu0
  %v802 = vadd.f32 %v662, %v801
  %v803 = vpop.f32.mrb[0].mxu0
  %804 = vmatprep.mubr.bf16.mxu0 0
  %805 = vmatmul.mubr.bf16.gmra.mrb[0].mxu0 %v695
  %v806 = vpop.f32.mrb[0].mxu0
  %v807 = vadd.f32 %v662, %v806
  %v808 = vpop.f32.mrb[0].mxu0
  %v809 = vpop.f32.mrb[0].mxu0
  %v810 = vadd.f32 %v662, %v809
  %v811 = vpop.f32.mrb[0].mxu0
  %812 = vmatprep.mubr.bf16.mxu0 0
  %813 = vmatmul.mubr.bf16.gmra.mrb[0].mxu0 %v698
  %v814 = vpop.f32.mrb[0].mxu0
  %v815 = vadd.f32 %v662, %v814
  %v816 = vpop.f32.mrb[0].mxu0
  %v817 = vpop.f32.mrb[0].mxu0
  %v818 = vadd.f32 %v662, %v817
  %v819 = vpop.f32.mrb[0].mxu0
  %820 = vmatprep.mubr.bf16.mxu0 0
  %821 = vmatmul.mubr.bf16.gmra.mrb[0].mxu0 %v701
  %v822 = vpop.f32.mrb[0].mxu0
  %v823 = vadd.f32 %v662, %v822
  %v824 = vpop.f32.mrb[0].mxu0
  %v825 = vpop.f32.mrb[0].mxu0
  %v826 = vadd.f32 %v662, %v825
  %v827 = vpop.f32.mrb[0].mxu0
  %828 = vmatprep.mubr.bf16.mxu0 0
  %829 = vmatmul.mubr.bf16.gmra.mrb[0].mxu0 %v704
  %v830 = vpop.f32.mrb[0].mxu0
  %v831 = vadd.f32 %v662, %v830
  %v832 = vpop.f32.mrb[0].mxu0
  %v833 = vpop.f32.mrb[0].mxu0
  %v834 = vadd.f32 %v662, %v833
  %v835 = vpop.f32.mrb[0].mxu0
  %836 = vmatprep.mubr.bf16.mxu0 0
  %837 = vmatmul.mubr.bf16.gmra.mrb[0].mxu0 %v707
  %v838 = vpop.f32.mrb[0].mxu0
  %v839 = vadd.f32 %v662, %v838
  %v840 = vpop.f32.mrb[0].mxu0
  %v841 = vpop.f32.mrb[0].mxu0
  %v842 = vadd.f32 %v662, %v841
  %v843 = vpop.f32.mrb[0].mxu0
  %844 = vmatprep.mubr.bf16.mxu0 0
  %845 = vmatmul.mubr.bf16.gmra.mrb[0].mxu0 %v710
  %v846 = vpop.f32.mrb[0].mxu0
  %v847 = vadd.f32 %v662, %v846
  %v848 = vpop.f32.mrb[0].mxu0
  %v849 = vpop.f32.mrb[0].mxu0
  %v850 = vadd.f32 %v662, %v849
  %v851 = vpop.f32.mrb[0].mxu0
  %852 = vmatprep.mubr.bf16.mxu0 0
  %853 = vmatmul.mubr.bf16.gmra.mrb[0].mxu0 %v713
  %v854 = vpop.f32.mrb[0].mxu0
  %v855 = vadd.f32 %v662, %v854
  %v856 = vpop.f32.mrb[0].mxu0
  %v857 = vpop.f32.mrb[0].mxu0
  %v858 = vadd.f32 %v662, %v857
  %v859 = vpop.f32.mrb[0].mxu0
  %860 = vmatprep.mubr.bf16.mxu0 0
  %861 = vmatmul.mubr.bf16.gmra.mrb[0].mxu0 %v716
  %v862 = vpop.f32.mrb[0].mxu0
  %v863 = vadd.f32 %v662, %v862
  %v864 = vpop.f32.mrb[0].mxu0
  %v865 = vpop.f32.mrb[0].mxu0
  %v866 = vadd.f32 %v662, %v865
  %v867 = vpop.f32.mrb[0].mxu0
  %868 = vmatprep.mubr.bf16.mxu0 0
  %869 = vmatmul.mubr.bf16.gmra.mrb[0].mxu0 %v719
  %v870 = vpop.f32.mrb[0].mxu0
  %v871 = vadd.f32 %v662, %v870
  %v872 = vpop.f32.mrb[0].mxu0
  %v873 = vpop.f32.mrb[0].mxu0
  %v874 = vadd.f32 %v662, %v873
  %v875 = vpop.f32.mrb[0].mxu0
  %876 = vmatprep.mubr.bf16.mxu0 0
  %877 = vmatmul.mubr.bf16.gmra.mrb[0].mxu0 %v722
  %v878 = vpop.f32.mrb[0].mxu0
  %v879 = vadd.f32 %v662, %v878
  %v880 = vpop.f32.mrb[0].mxu0
  %v881 = vpop.f32.mrb[0].mxu0
  %v882 = vadd.f32 %v662, %v881
  %v883 = vpop.f32.mrb[0].mxu0
  %884 = vdwg.mxu0
  %vm885 = vcmask 15360
  %886 = vst.msk [vmem:[%s7] sm:$0xff] %vm885, %v759
  %887 = vst.msk [vmem:[%s7 + $0x8] sm:$0xff] %vm885, %v762
  %888 = vst.msk [vmem:[%s7 + $0x10] sm:$0xff] %vm885, %v767
  %889 = vst.msk [vmem:[%s7 + $0x18] sm:$0xff] %vm885, %v770
  %890 = vst.msk [vmem:[%s7 + $0x20] sm:$0xff] %vm885, %v775
  %891 = vst.msk [vmem:[%s7 + $0x28] sm:$0xff] %vm885, %v778
  %892 = vst.msk [vmem:[%s7 + $0x30] sm:$0xff] %vm885, %v783
  %893 = vst.msk [vmem:[%s7 + $0x38] sm:$0xff] %vm885, %v786
  %894 = vst.msk [vmem:[%s7 + $0x40] sm:$0xff] %vm885, %v791
  %895 = vst.msk [vmem:[%s7 + $0x48] sm:$0xff] %vm885, %v794
  %896 = vst.msk [vmem:[%s7 + $0x50] sm:$0xff] %vm885, %v799
  %897 = vst.msk [vmem:[%s7 + $0x58] sm:$0xff] %vm885, %v802
  %898 = vst.msk [vmem:[%s7 + $0x60] sm:$0xff] %vm885, %v807
  %899 = vst.msk [vmem:[%s7 + $0x68] sm:$0xff] %vm885, %v810
  %900 = vst.msk [vmem:[%s7 + $0x70] sm:$0xff] %vm885, %v815
  %901 = vst.msk [vmem:[%s7 + $0x78] sm:$0xff] %vm885, %v818
  %902 = vst.msk [vmem:[%s7 + $0x80] sm:$0xff] %vm885, %v823
  %903 = vst.msk [vmem:[%s7 + $0x88] sm:$0xff] %vm885, %v826
  %904 = vst.msk [vmem:[%s7 + $0x90] sm:$0xff] %vm885, %v831
  %905 = vst.msk [vmem:[%s7 + $0x98] sm:$0xff] %vm885, %v834
  %906 = vst.msk [vmem:[%s7 + $0xa0] sm:$0xff] %vm885, %v839
  %907 = vst.msk [vmem:[%s7 + $0xa8] sm:$0xff] %vm885, %v842
  %908 = vst.msk [vmem:[%s7 + $0xb0] sm:$0xff] %vm885, %v847
  %909 = vst.msk [vmem:[%s7 + $0xb8] sm:$0xff] %vm885, %v850
  %910 = vst.msk [vmem:[%s7 + $0xc0] sm:$0xff] %vm885, %v855
  %911 = vst.msk [vmem:[%s7 + $0xc8] sm:$0xff] %vm885, %v858
  %912 = vst.msk [vmem:[%s7 + $0xd0] sm:$0xff] %vm885, %v863
  %913 = vst.msk [vmem:[%s7 + $0xd8] sm:$0xff] %vm885, %v866
  %914 = vst.msk [vmem:[%s7 + $0xe0] sm:$0xff] %vm885, %v871
  %915 = vst.msk [vmem:[%s7 + $0xe8] sm:$0xff] %vm885, %v874
  %916 = vst.msk [vmem:[%s7 + $0xf0] sm:$0xff] %vm885, %v879
  %917 = vst.msk [vmem:[%s7 + $0xf8] sm:$0xff] %vm885, %v882
  // Predicated region
  $region30: #{estimator_forward.1} parent=0 // pred_check
    _
  $region31: #{estimator_forward.1} parent=0 // pred_check_branch
    %919 = sbr.rel (0) target = $region33
  $region32: #{estimator_forward.1} parent=0 // pred_region
    _
  $region33: #{estimator_forward.1} parent=0 // pred_fallthru
    _
  // Predicated region
  $region34: #{estimator_forward.1} parent=0 // pred_check
    _
  $region35: #{estimator_forward.1} parent=0 // pred_check_branch
    %921 = sbr.rel (0) target = $region37
  $region36: #{estimator_forward.1} parent=0 // pred_region
    _
  $region37: #{estimator_forward.1} parent=0 // pred_fallthru
    _

</llo_original>
